<compile_context>
chip_gen: v7x
topology: tpu7x:2x2x1
jax: 0.10.0
libtpu: 0.0.40
codegen_flags: <defaults>
</compile_context>

<pallas_src>
import jax
import jax.numpy as jnp
from jax.experimental import pallas as pl
from jax.experimental.pallas import tpu as pltpu


def _round_up(n: int, m: int) -> int:
    return ((n + m - 1) // m) * m


def _tensorcores_per_chip() -> int:
    """2 on v7x (two TensorCores per chip), 1 elsewhere / unknown."""
    try:
        kind = jax.devices()[0].device_kind.lower()
    except Exception:
        return 1
    return 2 if ("v7" in kind or "7x" in kind) else 1


def _default_compute_dtype():
    """bf16 matmul operands on bf16-native v6e/v7x; f32 on v5e / older / unknown."""
    try:
        kind = jax.devices()[0].device_kind.lower()
    except Exception:
        return jnp.float32
    if "v6" in kind or "v7" in kind or "7x" in kind:
        return jnp.bfloat16
    return jnp.float32


def _ffn_kernel(x_ref, w1_ref, b1_ref, w2_ref, b2_ref, w3_ref, b3_ref, o_ref):
    """Fused 3-layer MLP (Dropout p=0.0 == identity).

    Lane-dense compute: the batch dimension sits on the 128-lane axis for every
    matmul (intermediates are (features, batch)).  x is read in its natural
    (bt, in) layout; the feature-axis contraction of layer 1 and the final
    (out, bt) -> (bt, out) transpose use the idle XLU slot, so no wrapper-side
    transposes are needed anywhere."""
    wdt = w1_ref.dtype                      # matmul operand dtype (f32 or bf16)
    x = x_ref[...].astype(wdt)              # (bt, in); cast is cheap VPU filler

    # Layer 1: h = W1 @ x^T  -> (hidden, bt), f32 accumulation on the MXU.
    h = jax.lax.dot_general(
        w1_ref[...], x, (((1,), (1,)), ((), ())),
        preferred_element_type=jnp.float32)
    h = jnp.maximum(h + b1_ref[...], 0.0)

    # Layer 2: Linear(hidden, hidden) + ReLU.
    h = jnp.dot(w2_ref[...], h.astype(wdt), preferred_element_type=jnp.float32)
    h = jnp.maximum(h + b2_ref[...], 0.0)

    # Layer 3: Linear(hidden, out), no activation; transpose the small
    # (out, bt) result back to (bt, out) in-kernel (XLU slot, effectively free).
    y = jnp.dot(w3_ref[...], h.astype(wdt), preferred_element_type=jnp.float32)
    o_ref[...] = jnp.transpose(y + b3_ref[...]).astype(o_ref.dtype)


def prepare_params(params, compute_dtype=None):
    """One-time layout / dtype prep, hoisted out of the per-call path.

    Torch Linear weights keep their native [out_features, in_features] layout
    (used directly as the MXU LHS).  Biases become column vectors [features, 1]
    so they broadcast along the lane (batch) axis.  compute_dtype defaults to
    bf16 on v6e/v7x and f32 on v5e/unknown; accumulation and the bias+ReLU
    epilogue are always f32."""
    if compute_dtype is None:
        compute_dtype = _default_compute_dtype()
    hidden = params["w1"].shape[0]
    out = params["w3"].shape[0]
    return {
        "w1": params["w1"].astype(compute_dtype),
        "w2": params["w2"].astype(compute_dtype),
        "w3": params["w3"].astype(compute_dtype),
        "b1": params["b1"].reshape(hidden, 1).astype(jnp.float32),
        "b2": params["b2"].reshape(hidden, 1).astype(jnp.float32),
        "b3": params["b3"].reshape(out, 1).astype(jnp.float32),
    }


def ffn_forward(x, prepared, *, batch_tile=4096):
    """x: [B, _in] (natural torch layout).  Returns [B, out]."""
    B, _in = x.shape
    hidden = prepared["w1"].shape[0]
    out = prepared["w3"].shape[0]

    # Batch tile: multiple of 128 (lane-dense matmul N, aligned sublane blocks).
    # Default 4096 -- sweep 2048-8192; per-step VMEM stays a few MiB on all chips.
    bt = _round_up(min(batch_tile, B), 128)

    # v7x: 2 TensorCores per chip -- keep at least 2 grid steps so the
    # "parallel" axis actually shards across both cores (weights are ~26 KB,
    # duplicating them into both cores' VMEM is free).  No-op on v5e/v6e.
    ncores = _tensorcores_per_chip()
    if ncores > 1 and B > 128:
        bt = min(bt, _round_up(pl.cdiv(B, ncores), 128))

    # Pad the batch only when it is ragged w.r.t. the tile (aligned batches pay
    # zero layout cost).  Padded rows only affect their own dropped output rows.
    Bp = _round_up(B, bt)
    xp = x if Bp == B else jnp.pad(x, ((0, Bp - B), (0, 0)))

    grid = (Bp // bt,)

    y = pl.pallas_call(
        _ffn_kernel,
        out_shape=jax.ShapeDtypeStruct((Bp, out), x.dtype),
        grid_spec=pl.GridSpec(
            grid=grid,
            in_specs=[
                # activations tiled over batch (natural [B, in] layout)
                pl.BlockSpec((bt, _in), lambda i: (i, 0)),
                # weights / biases: full arrays, same block every step (resident)
                pl.BlockSpec((hidden, _in), lambda i: (0, 0)),
                pl.BlockSpec((hidden, 1), lambda i: (0, 0)),
                pl.BlockSpec((hidden, hidden), lambda i: (0, 0)),
                pl.BlockSpec((hidden, 1), lambda i: (0, 0)),
                pl.BlockSpec((out, hidden), lambda i: (0, 0)),
                pl.BlockSpec((out, 1), lambda i: (0, 0)),
            ],
            out_specs=pl.BlockSpec((bt, out), lambda i: (i, 0)),
        ),
        compiler_params=pltpu.CompilerParams(
            dimension_semantics=("parallel",)),  # shards tiles across TCs on v7x
    )(xp, prepared["w1"], prepared["b1"], prepared["w2"], prepared["b2"],
      prepared["w3"], prepared["b3"])

    return y if Bp == B else y[:B]


def _torch_linear_init(key, out_features, in_features):
    """Deterministic init mimicking nn.Linear defaults: U(-1/sqrt(in), 1/sqrt(in))."""
    kw, kb = jax.random.split(key)
    bound = 1.0 / jnp.sqrt(jnp.float32(in_features))
    w = jax.random.uniform(kw, (out_features, in_features), jnp.float32, -bound, bound)
    b = jax.random.uniform(kb, (out_features,), jnp.float32, -bound, bound)
    return w, b


def ffn_reference(x, params):
    """Pure-JAX reference of the PyTorch forward (eval semantics, p=0.0 dropout)."""
    h = x @ params["w1"].T + params["b1"]
    h = jnp.maximum(h, 0.0)
    h = h @ params["w2"].T + params["b2"]
    h = jnp.maximum(h, 0.0)
    return h @ params["w3"].T + params["b3"]


if __name__ == "__main__":
    # FFN(_in=32, out=16, depth=3, numOfHiddenParams=64,
    #     dropoutRate=0.0, enableBatchNorm=False, activationFunction="ReLU")
    _in, hidden, out = 32, 64, 16

    key = jax.random.PRNGKey(0)
    kx, k1, k2, k3 = jax.random.split(key, 4)

    w1, b1 = _torch_linear_init(k1, hidden, _in)
    w2, b2 = _torch_linear_init(k2, hidden, hidden)
    w3, b3 = _torch_linear_init(k3, out, hidden)
    params = {"w1": w1, "b1": b1, "w2": w2, "b2": b2, "w3": w3, "b3": b3}

    prepared_f32 = prepare_params(params, compute_dtype=jnp.float32)
    prepared_auto = prepare_params(params)  # bf16 on v6e/v7x, f32 elsewhere
    auto_is_bf16 = prepared_auto["w1"].dtype == jnp.bfloat16
    auto_tol = dict(atol=5e-2, rtol=5e-2) if auto_is_bf16 else dict(atol=1e-5, rtol=1e-5)

    # Small batch (single 128-row tile after remainder padding; grid length 1).
    x_small = jax.random.normal(kx, (8, _in), jnp.float32)
    y_ref_small = ffn_reference(x_small, params)
    y_small = jax.block_until_ready(ffn_forward(x_small, prepared_f32))
    assert y_small.shape == (8, out)
    assert jnp.allclose(y_small, y_ref_small, atol=1e-5, rtol=1e-5), \
        "Pallas FFN mismatch vs reference (small batch, f32)"

    # Larger aligned batch: exercises multi-tile pipelining (f32, 128-row tiles)
    # and the default (auto-dtype, big-tile) path.
    x_big = jax.random.normal(kx, (512, _in), jnp.float32)
    y_ref_big = ffn_reference(x_big, params)
    y_big_f32 = jax.block_until_ready(ffn_forward(x_big, prepared_f32, batch_tile=128))
    assert y_big_f32.shape == (512, out)
    assert jnp.allclose(y_big_f32, y_ref_big, atol=1e-5, rtol=1e-5), \
        "Pallas FFN mismatch vs reference (multi-tile batch, f32)"
    y_big_auto = jax.block_until_ready(ffn_forward(x_big, prepared_auto))
    assert y_big_auto.shape == (512, out)
    assert jnp.allclose(y_big_auto, y_ref_big, **auto_tol), \
        "Pallas FFN mismatch vs reference (default compute dtype path)"

    # Ragged batch: only the last-tile remainder is padded; outputs sliced back.
    x_rag = jax.random.normal(kx, (300, _in), jnp.float32)
    y_rag = jax.block_until_ready(ffn_forward(x_rag, prepared_f32, batch_tile=128))
    assert y_rag.shape == (300, out)
    assert jnp.allclose(y_rag, ffn_reference(x_rag, params), atol=1e-5, rtol=1e-5), \
        "Pallas FFN mismatch vs reference (ragged batch, f32)"

    # TODO(synk): BatchNorm1d branch (enableBatchNorm=True), training-mode dropout
    # masking, and arbitrary `depth` generalization are not exercised in this config.
    print("KERNEL_OK")
</pallas_src>

<mosaic_0001>
module attributes {stable_mosaic.version = 11 : i64} {
  func.func @_ffn_kernel(%arg0: i32, %arg1: memref<128x32xf32, #tpu.memory_space<vmem>>, %arg2: memref<64x32xf32, #tpu.memory_space<vmem>>, %arg3: memref<64x1xf32, #tpu.memory_space<vmem>>, %arg4: memref<64x64xf32, #tpu.memory_space<vmem>>, %arg5: memref<64x1xf32, #tpu.memory_space<vmem>>, %arg6: memref<16x64xf32, #tpu.memory_space<vmem>>, %arg7: memref<16x1xf32, #tpu.memory_space<vmem>>, %arg8: memref<128x16xf32, #tpu.memory_space<vmem>>) attributes {dimension_semantics = [#tpu.dimension_semantics<parallel>], iteration_bounds = array<i64: 1>, scalar_prefetch = 0 : i64, scratch_operands = 0 : i64, tpu.core_type = #tpu.core_type<tc>, window_params = [{transform_indices = @transform_0, window_bounds = array<i64: 128, 32>}, {pipeline_mode = #tpu.pipeline_mode<synchronous>, transform_indices = @transform_1, window_bounds = array<i64: 64, 32>}, {pipeline_mode = #tpu.pipeline_mode<synchronous>, transform_indices = @transform_2, window_bounds = array<i64: 64, 1>}, {pipeline_mode = #tpu.pipeline_mode<synchronous>, transform_indices = @transform_3, window_bounds = array<i64: 64, 64>}, {pipeline_mode = #tpu.pipeline_mode<synchronous>, transform_indices = @transform_4, window_bounds = array<i64: 64, 1>}, {pipeline_mode = #tpu.pipeline_mode<synchronous>, transform_indices = @transform_5, window_bounds = array<i64: 16, 64>}, {pipeline_mode = #tpu.pipeline_mode<synchronous>, transform_indices = @transform_6, window_bounds = array<i64: 16, 1>}, {transform_indices = @transform_7, window_bounds = array<i64: 128, 16>}]} {
    %c0 = arith.constant 0 : index
    %c0_0 = arith.constant 0 : index
    %0 = vector.load %arg1[%c0, %c0_0] : memref<128x32xf32, #tpu.memory_space<vmem>>, vector<128x32xf32>
    %c0_1 = arith.constant 0 : index
    %c0_2 = arith.constant 0 : index
    %1 = vector.load %arg2[%c0_1, %c0_2] : memref<64x32xf32, #tpu.memory_space<vmem>>, vector<64x32xf32>
    %cst = arith.constant dense<0.000000e+00> : vector<64x128xf32>
    %2 = tpu.matmul %1, %0, %cst {dimension_numbers = #tpu.dot_dimension_numbers<[1], [1], [0], [0], [0, 0, 1, 0], [], []>} : vector<64x32xf32>, vector<128x32xf32>, vector<64x128xf32> -> vector<64x128xf32>
    %c0_3 = arith.constant 0 : index
    %c0_4 = arith.constant 0 : index
    %3 = vector.load %arg3[%c0_3, %c0_4] : memref<64x1xf32, #tpu.memory_space<vmem>>, vector<64x1xf32>
    %4 = vector.broadcast %3 : vector<64x1xf32> to vector<64x128xf32>
    %5 = arith.addf %2, %4 : vector<64x128xf32>
    %cst_5 = arith.constant 0.000000e+00 : f32
    %6 = vector.broadcast %cst_5 : f32 to vector<64x128xf32>
    %7 = arith.maximumf %5, %6 : vector<64x128xf32>
    %c0_6 = arith.constant 0 : index
    %c0_7 = arith.constant 0 : index
    %8 = vector.load %arg4[%c0_6, %c0_7] : memref<64x64xf32, #tpu.memory_space<vmem>>, vector<64x64xf32>
    %cst_8 = arith.constant dense<0.000000e+00> : vector<64x128xf32>
    %9 = tpu.matmul %8, %7, %cst_8 {dimension_numbers = #tpu.dot_dimension_numbers<[1], [0], [0], [1], [0, 0, 1, 1], [], []>} : vector<64x64xf32>, vector<64x128xf32>, vector<64x128xf32> -> vector<64x128xf32>
    %c0_9 = arith.constant 0 : index
    %c0_10 = arith.constant 0 : index
    %10 = vector.load %arg5[%c0_9, %c0_10] : memref<64x1xf32, #tpu.memory_space<vmem>>, vector<64x1xf32>
    %11 = vector.broadcast %10 : vector<64x1xf32> to vector<64x128xf32>
    %12 = arith.addf %9, %11 : vector<64x128xf32>
    %cst_11 = arith.constant 0.000000e+00 : f32
    %13 = vector.broadcast %cst_11 : f32 to vector<64x128xf32>
    %14 = arith.maximumf %12, %13 : vector<64x128xf32>
    %c0_12 = arith.constant 0 : index
    %c0_13 = arith.constant 0 : index
    %15 = vector.load %arg6[%c0_12, %c0_13] : memref<16x64xf32, #tpu.memory_space<vmem>>, vector<16x64xf32>
    %cst_14 = arith.constant dense<0.000000e+00> : vector<16x128xf32>
    %16 = tpu.matmul %15, %14, %cst_14 {dimension_numbers = #tpu.dot_dimension_numbers<[1], [0], [0], [1], [0, 0, 1, 1], [], []>} : vector<16x64xf32>, vector<64x128xf32>, vector<16x128xf32> -> vector<16x128xf32>
    %c0_15 = arith.constant 0 : index
    %c0_16 = arith.constant 0 : index
    %17 = vector.load %arg7[%c0_15, %c0_16] : memref<16x1xf32, #tpu.memory_space<vmem>>, vector<16x1xf32>
    %18 = vector.broadcast %17 : vector<16x1xf32> to vector<16x128xf32>
    %19 = arith.addf %16, %18 : vector<16x128xf32>
    %20 = tpu.transpose %19, [1, 0] : vector<16x128xf32> -> vector<128x16xf32>
    %c0_17 = arith.constant 0 : index
    %c0_18 = arith.constant 0 : index
    %21 = vector.load %arg8[%c0_17, %c0_18] : memref<128x16xf32, #tpu.memory_space<vmem>>, vector<128x16xf32>
    tpu.vector_store %arg8[%c0_17, %c0_18], %20 {strides = array<i32>} : memref<128x16xf32, #tpu.memory_space<vmem>>, vector<128x16xf32>,
    return
  }
  func.func @transform_0(%arg0: i32) -> (i32, i32) {
    %c0_i32 = arith.constant 0 : i32
    %c0_i32_0 = arith.constant 0 : i32
    return %arg0, %c0_i32 : i32, i32
  }
  func.func @transform_1(%arg0: i32) -> (i32, i32) {
    %c0_i32 = arith.constant 0 : i32
    %c0_i32_0 = arith.constant 0 : i32
    %c0_i32_1 = arith.constant 0 : i32
    return %c0_i32, %c0_i32_0 : i32, i32
  }
  func.func @transform_2(%arg0: i32) -> (i32, i32) {
    %c0_i32 = arith.constant 0 : i32
    %c0_i32_0 = arith.constant 0 : i32
    %c0_i32_1 = arith.constant 0 : i32
    return %c0_i32, %c0_i32_0 : i32, i32
  }
  func.func @transform_3(%arg0: i32) -> (i32, i32) {
    %c0_i32 = arith.constant 0 : i32
    %c0_i32_0 = arith.constant 0 : i32
    %c0_i32_1 = arith.constant 0 : i32
    return %c0_i32, %c0_i32_0 : i32, i32
  }
  func.func @transform_4(%arg0: i32) -> (i32, i32) {
    %c0_i32 = arith.constant 0 : i32
    %c0_i32_0 = arith.constant 0 : i32
    %c0_i32_1 = arith.constant 0 : i32
    return %c0_i32, %c0_i32_0 : i32, i32
  }
  func.func @transform_5(%arg0: i32) -> (i32, i32) {
    %c0_i32 = arith.constant 0 : i32
    %c0_i32_0 = arith.constant 0 : i32
    %c0_i32_1 = arith.constant 0 : i32
    return %c0_i32, %c0_i32_0 : i32, i32
  }
  func.func @transform_6(%arg0: i32) -> (i32, i32) {
    %c0_i32 = arith.constant 0 : i32
    %c0_i32_0 = arith.constant 0 : i32
    %c0_i32_1 = arith.constant 0 : i32
    return %c0_i32, %c0_i32_0 : i32, i32
  }
  func.func @transform_7(%arg0: i32) -> (i32, i32) {
    %c0_i32 = arith.constant 0 : i32
    %c0_i32_0 = arith.constant 0 : i32
    return %arg0, %c0_i32 : i32, i32
  }
}

</mosaic_0001>

<llo_original>
// kernel: tpu_custom_call.1
$region0: #{tpu_custom_call.1}
  #allocation0 [shape = 'u32[]', space=smem, size = 0x4, offset = 0x4, fixed_abs, tag = 'smem constant byte address 0x4 - core index']
  #allocation1 [shape = 'u32[144,128]{1,0:T(1,128)}', space=vmem, size = 0x12000, scoped, tag = 'internal scratch']
  %s0 = inlined_call_operand.vmem [shape: f32[128,32], index: 0, kind: input, shape index: {}]
  %s1 = inlined_call_operand.vmem [shape: f32[64,32], index: 1, kind: input, shape index: {}]
  %s2 = inlined_call_operand.vmem [shape: f32[64,1], index: 2, kind: input, shape index: {}]
  %s3 = inlined_call_operand.vmem [shape: f32[64,64], index: 3, kind: input, shape index: {}]
  %s4 = inlined_call_operand.vmem [shape: f32[64,1], index: 4, kind: input, shape index: {}]
  %s5 = inlined_call_operand.vmem [shape: f32[16,64], index: 5, kind: input, shape index: {}]
  %s6 = inlined_call_operand.vmem [shape: f32[16,1], index: 6, kind: input, shape index: {}]
  %s7 = inlined_call_operand.vmem [shape: f32[128,16], index: 7, kind: output, shape index: {}]
  %s8 = sld [smem:[#allocation0]]
  $region38: #{tpu_custom_call.1} parent=0
    _
  %s10 = ssub.s32 1, %s8
  %s11 = scalar_select 0, %s10, %s8
  // Predicated region
  $region2: #{tpu_custom_call.1} parent=0 // pred_check
    _
  $region3: #{tpu_custom_call.1} parent=0 // pred_check_branch
    %13 = sbr.rel (0) target = $region5
  $region4: #{tpu_custom_call.1} parent=0 // pred_region
    _
  $region5: #{tpu_custom_call.1} parent=0 // pred_fallthru
    _
  // Predicated region
  $region6: #{tpu_custom_call.1} parent=0 // pred_check
    _
  $region7: #{tpu_custom_call.1} parent=0 // pred_check_branch
    %15 = sbr.rel (0) target = $region9
  $region8: #{tpu_custom_call.1} parent=0 // pred_region
    _
  $region9: #{tpu_custom_call.1} parent=0 // pred_fallthru
    _
  // Predicated region
  $region10: #{tpu_custom_call.1} parent=0 // pred_check
    _
  $region11: #{tpu_custom_call.1} parent=0 // pred_check_branch
    %17 = sbr.rel (0) target = $region13
  $region12: #{tpu_custom_call.1} parent=0 // pred_region
    _
  $region13: #{tpu_custom_call.1} parent=0 // pred_fallthru
    _
  // Predicated region
  $region14: #{tpu_custom_call.1} parent=0 // pred_check
    _
  $region15: #{tpu_custom_call.1} parent=0 // pred_check_branch
    %19 = sbr.rel (0) target = $region17
  $region16: #{tpu_custom_call.1} parent=0 // pred_region
    _
  $region17: #{tpu_custom_call.1} parent=0 // pred_fallthru
    _
  // Predicated region
  $region18: #{tpu_custom_call.1} parent=0 // pred_check
    _
  $region19: #{tpu_custom_call.1} parent=0 // pred_check_branch
    %21 = sbr.rel (0) target = $region21
  $region20: #{tpu_custom_call.1} parent=0 // pred_region
    _
  $region21: #{tpu_custom_call.1} parent=0 // pred_fallthru
    _
  // Predicated region
  $region22: #{tpu_custom_call.1} parent=0 // pred_check
    _
  $region23: #{tpu_custom_call.1} parent=0 // pred_check_branch
    %23 = sbr.rel (0) target = $region25
  $region24: #{tpu_custom_call.1} parent=0 // pred_region
    _
  $region25: #{tpu_custom_call.1} parent=0 // pred_fallthru
    _
  // Predicated region
  $region26: #{tpu_custom_call.1} parent=0 // pred_check
    _
  $region27: #{tpu_custom_call.1} parent=0 // pred_check_branch
    %25 = sbr.rel (0) target = $region29
  $region28: #{tpu_custom_call.1} parent=0 // pred_region
    _
  $region29: #{tpu_custom_call.1} parent=0 // pred_fallthru
    _
  %v26 = vld [vmem:[%s0] sm:$0xff]
  %v27 = vld [vmem:[%s0 + $0x8] sm:$0xff]
  %v28 = vld [vmem:[%s0 + $0x10] sm:$0xff]
  %v29 = vld [vmem:[%s0 + $0x18] sm:$0xff]
  %v30 = vld [vmem:[%s0 + $0x20] sm:$0xff]
  %v31 = vld [vmem:[%s0 + $0x28] sm:$0xff]
  %v32 = vld [vmem:[%s0 + $0x30] sm:$0xff]
  %v33 = vld [vmem:[%s0 + $0x38] sm:$0xff]
  %v34 = vld [vmem:[%s0 + $0x40] sm:$0xff]
  %v35 = vld [vmem:[%s0 + $0x48] sm:$0xff]
  %v36 = vld [vmem:[%s0 + $0x50] sm:$0xff]
  %v37 = vld [vmem:[%s0 + $0x58] sm:$0xff]
  %v38 = vld [vmem:[%s0 + $0x60] sm:$0xff]
  %v39 = vld [vmem:[%s0 + $0x68] sm:$0xff]
  %v40 = vld [vmem:[%s0 + $0x70] sm:$0xff]
  %v41 = vld [vmem:[%s0 + $0x78] sm:$0xff]
  %v42 = vld [vmem:[%s1] sm:$0xff]
  %v43 = vld [vmem:[%s1 + $0x8] sm:$0xff]
  %v44 = vld [vmem:[%s1 + $0x10] sm:$0xff]
  %v45 = vld [vmem:[%s1 + $0x18] sm:$0xff]
  %v46 = vld [vmem:[%s1 + $0x20] sm:$0xff]
  %v47 = vld [vmem:[%s1 + $0x28] sm:$0xff]
  %v48 = vld [vmem:[%s1 + $0x30] sm:$0xff]
  %v49 = vld [vmem:[%s1 + $0x38] sm:$0xff]
  %v50 = vld [vmem:[%s2] sm:$0xff]
  %v51 = vld [vmem:[%s2 + $0x8] sm:$0xff]
  %v52 = vld [vmem:[%s2 + $0x10] sm:$0xff]
  %v53 = vld [vmem:[%s2 + $0x18] sm:$0xff]
  %v54 = vld [vmem:[%s2 + $0x20] sm:$0xff]
  %v55 = vld [vmem:[%s2 + $0x28] sm:$0xff]
  %v56 = vld [vmem:[%s2 + $0x30] sm:$0xff]
  %v57 = vld [vmem:[%s2 + $0x38] sm:$0xff]
  %59 = vset.pattern.permute.xlu0 0
  %60 = vperm.xlu0 %59, %v50
  %v61 = vpop.permute.xlu0 %60
  %64 = vset.pattern.permute.xlu0 0
  %65 = vperm.xlu0 %64, %v51
  %v66 = vpop.permute.xlu0 %65
  %69 = vset.pattern.permute.xlu0 0
  %70 = vperm.xlu0 %69, %v52
  %v71 = vpop.permute.xlu0 %70
  %74 = vset.pattern.permute.xlu0 0
  %75 = vperm.xlu0 %74, %v53
  %v76 = vpop.permute.xlu0 %75
  %79 = vset.pattern.permute.xlu0 0
  %80 = vperm.xlu0 %79, %v54
  %v81 = vpop.permute.xlu0 %80
  %84 = vset.pattern.permute.xlu0 0
  %85 = vperm.xlu0 %84, %v55
  %v86 = vpop.permute.xlu0 %85
  %89 = vset.pattern.permute.xlu0 0
  %90 = vperm.xlu0 %89, %v56
  %v91 = vpop.permute.xlu0 %90
  %94 = vset.pattern.permute.xlu0 0
  %95 = vperm.xlu0 %94, %v57
  %v96 = vpop.permute.xlu0 %95
  %vm98 = vcmask 261120
  %v100 = vsel %vm98, %v42, 0
  %v103 = vsel %vm98, %v43, 0
  %v106 = vsel %vm98, %v44, 0
  %v109 = vsel %vm98, %v45, 0
  %v112 = vsel %vm98, %v46, 0
  %v115 = vsel %vm98, %v47, 0
  %v118 = vsel %vm98, %v48, 0
  %v121 = vsel %vm98, %v49, 0
  %v124 = vsel %vm98, %v26, 0
  %v127 = vsel %vm98, %v27, 0
  %v130 = vsel %vm98, %v28, 0
  %v133 = vsel %vm98, %v29, 0
  %v136 = vsel %vm98, %v30, 0
  %v139 = vsel %vm98, %v31, 0
  %v142 = vsel %vm98, %v32, 0
  %v145 = vsel %vm98, %v33, 0
  %v148 = vsel %vm98, %v34, 0
  %v151 = vsel %vm98, %v35, 0
  %v154 = vsel %vm98, %v36, 0
  %v157 = vsel %vm98, %v37, 0
  %v160 = vsel %vm98, %v38, 0
  %v163 = vsel %vm98, %v39, 0
  %v166 = vsel %vm98, %v40, 0
  %v169 = vsel %vm98, %v41, 0
  %171 = vmatprep.subr.mxu0 0.0
  %172 = vmatpush1.xpose.msra.mxu0 %v124
  %173 = vmatprep.subr.mxu0 0.0
  %174 = vmatpush1.xpose.msra.mxu0 %v127
  %175 = vmatprep.subr.mxu0 0.0
  %176 = vmatpush1.xpose.msra.mxu0 %v130
  %177 = vmatprep.subr.mxu0 0.0
  %178 = vmatpush1.xpose.msra.mxu0 %v133
  %179 = vmatprep.subr.mxu0 0.0
  %180 = vmatpush1.xpose.msra.mxu0 %v136
  %181 = vmatprep.subr.mxu0 0.0
  %182 = vmatpush1.xpose.msra.mxu0 %v139
  %183 = vmatprep.subr.mxu0 0.0
  %184 = vmatpush1.xpose.msra.mxu0 %v142
  %185 = vmatprep.subr.mxu0 0.0
  %186 = vmatpush1.xpose.msra.mxu0 %v145
  %187 = vmatprep.subr.mxu0 0.0
  %188 = vmatpush1.xpose.msra.mxu0 %v148
  %189 = vmatprep.subr.mxu0 0.0
  %190 = vmatpush1.xpose.msra.mxu0 %v151
  %191 = vmatprep.subr.mxu0 0.0
  %192 = vmatpush1.xpose.msra.mxu0 %v154
  %193 = vmatprep.subr.mxu0 0.0
  %194 = vmatpush1.xpose.msra.mxu0 %v157
  %195 = vmatprep.subr.mxu0 0.0
  %196 = vmatpush1.xpose.msra.mxu0 %v160
  %197 = vmatprep.subr.mxu0 0.0
  %198 = vmatpush1.xpose.msra.mxu0 %v163
  %199 = vmatprep.subr.mxu0 0.0
  %200 = vmatpush1.xpose.msra.mxu0 %v166
  %201 = vmatprep.subr.mxu0 0.0
  %202 = vmatpush1.xpose.msra.mxu0 %v169
  %203 = vmatprep.subr.mxu0 0.0
  %204 = vmatpush1.xpose.msra.mxu0 0.0
  %205 = vmatprep.subr.mxu0 0.0
  %206 = vmatpush1.xpose.msra.mxu0 0.0
  %207 = vmatprep.subr.mxu0 0.0
  %208 = vmatpush1.xpose.msra.mxu0 0.0
  %209 = vmatprep.subr.mxu0 0.0
  %210 = vmatpush1.xpose.msra.mxu0 0.0
  %211 = vmatprep.subr.mxu0 0.0
  %212 = vmatpush1.xpose.msra.mxu0 0.0
  %213 = vmatprep.subr.mxu0 0.0
  %214 = vmatpush1.xpose.msra.mxu0 0.0
  %215 = vmatprep.subr.mxu0 0.0
  %216 = vmatpush1.xpose.msra.mxu0 0.0
  %217 = vmatprep.subr.mxu0 0.0
  %218 = vmatpush1.xpose.msra.mxu0 0.0
  %219 = vmatprep.subr.mxu0 0.0
  %220 = vmatpush1.xpose.msra.mxu0 0.0
  %221 = vmatprep.subr.mxu0 0.0
  %222 = vmatpush1.xpose.msra.mxu0 0.0
  %223 = vmatprep.subr.mxu0 0.0
  %224 = vmatpush1.xpose.msra.mxu0 0.0
  %225 = vmatprep.subr.mxu0 0.0
  %226 = vmatpush1.xpose.msra.mxu0 0.0
  %227 = vmatprep.subr.mxu0 0.0
  %228 = vmatpush1.xpose.msra.mxu0 0.0
  %229 = vmatprep.subr.mxu0 0.0
  %230 = vmatpush1.xpose.msra.mxu0 0.0
  %231 = vmatprep.subr.mxu0 0.0
  %232 = vmatpush1.xpose.msra.mxu0 0.0
  %233 = vmatprep.subr.mxu0 0.0
  %234 = vmatpush1.xpose.msra.mxu0 0.0
  %235 = vmatprep.mubr.f32.mxu0 0.0
  %236 = vmatmul.mubr.f32.gmra.mrb[0].mxu0 %v100
  %v237 = vpop.f32.mrb[0].mxu0
  %v238 = vadd.f32 %v61, %v237
  %v239 = vpop.f32.mrb[0].mxu0
  %240 = vmatprep.mubr.f32.mxu0 0.0
  %241 = vmatmul.mubr.f32.gmra.mrb[0].mxu0 %v103
  %v242 = vpop.f32.mrb[0].mxu0
  %v243 = vadd.f32 %v66, %v242
  %v244 = vpop.f32.mrb[0].mxu0
  %245 = vmatprep.mubr.f32.mxu0 0.0
  %246 = vmatmul.mubr.f32.gmra.mrb[0].mxu0 %v106
  %v247 = vpop.f32.mrb[0].mxu0
  %v248 = vadd.f32 %v71, %v247
  %v249 = vpop.f32.mrb[0].mxu0
  %250 = vmatprep.mubr.f32.mxu0 0.0
  %251 = vmatmul.mubr.f32.gmra.mrb[0].mxu0 %v109
  %v252 = vpop.f32.mrb[0].mxu0
  %v253 = vadd.f32 %v76, %v252
  %v254 = vpop.f32.mrb[0].mxu0
  %255 = vmatprep.mubr.f32.mxu0 0.0
  %256 = vmatmul.mubr.f32.gmra.mrb[0].mxu0 %v112
  %v257 = vpop.f32.mrb[0].mxu0
  %v258 = vadd.f32 %v81, %v257
  %v259 = vpop.f32.mrb[0].mxu0
  %260 = vmatprep.mubr.f32.mxu0 0.0
  %261 = vmatmul.mubr.f32.gmra.mrb[0].mxu0 %v115
  %v262 = vpop.f32.mrb[0].mxu0
  %v263 = vadd.f32 %v86, %v262
  %v264 = vpop.f32.mrb[0].mxu0
  %265 = vmatprep.mubr.f32.mxu0 0.0
  %266 = vmatmul.mubr.f32.gmra.mrb[0].mxu0 %v118
  %v267 = vpop.f32.mrb[0].mxu0
  %v268 = vadd.f32 %v91, %v267
  %v269 = vpop.f32.mrb[0].mxu0
  %270 = vmatprep.mubr.f32.mxu0 0.0
  %271 = vmatmul.mubr.f32.gmra.mrb[0].mxu0 %v121
  %v272 = vpop.f32.mrb[0].mxu0
  %v273 = vadd.f32 %v96, %v272
  %v274 = vpop.f32.mrb[0].mxu0
  %275 = vdwg.mxu0
  %v276 = vmax.f32 %v238, 0.0
  %v277 = vmax.f32 %v243, 0.0
  %v278 = vmax.f32 %v248, 0.0
  %v279 = vmax.f32 %v253, 0.0
  %v280 = vmax.f32 %v258, 0.0
  %v281 = vmax.f32 %v263, 0.0
  %v282 = vmax.f32 %v268, 0.0
  %v283 = vmax.f32 %v273, 0.0
  %v284 = vld [vmem:[%s3] sm:$0xff]
  %v285 = vld [vmem:[%s3 + $0x8] sm:$0xff]
  %v286 = vld [vmem:[%s3 + $0x10] sm:$0xff]
  %v287 = vld [vmem:[%s3 + $0x18] sm:$0xff]
  %v288 = vld [vmem:[%s3 + $0x20] sm:$0xff]
  %v289 = vld [vmem:[%s3 + $0x28] sm:$0xff]
  %v290 = vld [vmem:[%s3 + $0x30] sm:$0xff]
  %v291 = vld [vmem:[%s3 + $0x38] sm:$0xff]
  %v292 = vld [vmem:[%s4] sm:$0xff]
  %v293 = vld [vmem:[%s4 + $0x8] sm:$0xff]
  %v294 = vld [vmem:[%s4 + $0x10] sm:$0xff]
  %v295 = vld [vmem:[%s4 + $0x18] sm:$0xff]
  %v296 = vld [vmem:[%s4 + $0x20] sm:$0xff]
  %v297 = vld [vmem:[%s4 + $0x28] sm:$0xff]
  %v298 = vld [vmem:[%s4 + $0x30] sm:$0xff]
  %v299 = vld [vmem:[%s4 + $0x38] sm:$0xff]
  %301 = vset.pattern.permute.xlu0 0
  %302 = vperm.xlu0 %301, %v292
  %v303 = vpop.permute.xlu0 %302
  %306 = vset.pattern.permute.xlu0 0
  %307 = vperm.xlu0 %306, %v293
  %v308 = vpop.permute.xlu0 %307
  %311 = vset.pattern.permute.xlu0 0
  %312 = vperm.xlu0 %311, %v294
  %v313 = vpop.permute.xlu0 %312
  %316 = vset.pattern.permute.xlu0 0
  %317 = vperm.xlu0 %316, %v295
  %v318 = vpop.permute.xlu0 %317
  %321 = vset.pattern.permute.xlu0 0
  %322 = vperm.xlu0 %321, %v296
  %v323 = vpop.permute.xlu0 %322
  %326 = vset.pattern.permute.xlu0 0
  %327 = vperm.xlu0 %326, %v297
  %v328 = vpop.permute.xlu0 %327
  %331 = vset.pattern.permute.xlu0 0
  %332 = vperm.xlu0 %331, %v298
  %v333 = vpop.permute.xlu0 %332
  %336 = vset.pattern.permute.xlu0 0
  %337 = vperm.xlu0 %336, %v299
  %v338 = vpop.permute.xlu0 %337
  %vm340 = vcmask 523264
  %v342 = vsel %vm340, %v284, 0
  %v345 = vsel %vm340, %v285, 0
  %v348 = vsel %vm340, %v286, 0
  %v351 = vsel %vm340, %v287, 0
  %v354 = vsel %vm340, %v288, 0
  %v357 = vsel %vm340, %v289, 0
  %v360 = vsel %vm340, %v290, 0
  %v363 = vsel %vm340, %v291, 0
  %365 = vmatprep.subr.mxu0 0.0
  %366 = vmatpush1.msra.mxu0 %v276
  %367 = vmatprep.subr.mxu0 0.0
  %368 = vmatpush1.msra.mxu0 %v277
  %369 = vmatprep.subr.mxu0 0.0
  %370 = vmatpush1.msra.mxu0 %v278
  %371 = vmatprep.subr.mxu0 0.0
  %372 = vmatpush1.msra.mxu0 %v279
  %373 = vmatprep.subr.mxu0 0.0
  %374 = vmatpush1.msra.mxu0 %v280
  %375 = vmatprep.subr.mxu0 0.0
  %376 = vmatpush1.msra.mxu0 %v281
  %377 = vmatprep.subr.mxu0 0.0
  %378 = vmatpush1.msra.mxu0 %v282
  %379 = vmatprep.subr.mxu0 0.0
  %380 = vmatpush1.msra.mxu0 %v283
  %381 = vmatprep.subr.mxu0 0.0
  %382 = vmatpush1.msra.mxu0 0.0
  %383 = vmatprep.subr.mxu0 0.0
  %384 = vmatpush1.msra.mxu0 0.0
  %385 = vmatprep.subr.mxu0 0.0
  %386 = vmatpush1.msra.mxu0 0.0
  %387 = vmatprep.subr.mxu0 0.0
  %388 = vmatpush1.msra.mxu0 0.0
  %389 = vmatprep.subr.mxu0 0.0
  %390 = vmatpush1.msra.mxu0 0.0
  %391 = vmatprep.subr.mxu0 0.0
  %392 = vmatpush1.msra.mxu0 0.0
  %393 = vmatprep.subr.mxu0 0.0
  %394 = vmatpush1.msra.mxu0 0.0
  %395 = vmatprep.subr.mxu0 0.0
  %396 = vmatpush1.msra.mxu0 0.0
  %397 = vmatprep.subr.mxu0 0.0
  %398 = vmatpush1.msra.mxu0 0.0
  %399 = vmatprep.subr.mxu0 0.0
  %400 = vmatpush1.msra.mxu0 0.0
  %401 = vmatprep.subr.mxu0 0.0
  %402 = vmatpush1.msra.mxu0 0.0
  %403 = vmatprep.subr.mxu0 0.0
  %404 = vmatpush1.msra.mxu0 0.0
  %405 = vmatprep.subr.mxu0 0.0
  %406 = vmatpush1.msra.mxu0 0.0
  %407 = vmatprep.subr.mxu0 0.0
  %408 = vmatpush1.msra.mxu0 0.0
  %409 = vmatprep.subr.mxu0 0.0
  %410 = vmatpush1.msra.mxu0 0.0
  %411 = vmatprep.subr.mxu0 0.0
  %412 = vmatpush1.msra.mxu0 0.0
  %413 = vmatprep.subr.mxu0 0.0
  %414 = vmatpush1.msra.mxu0 0.0
  %415 = vmatprep.subr.mxu0 0.0
  %416 = vmatpush1.msra.mxu0 0.0
  %417 = vmatprep.subr.mxu0 0.0
  %418 = vmatpush1.msra.mxu0 0.0
  %419 = vmatprep.subr.mxu0 0.0
  %420 = vmatpush1.msra.mxu0 0.0
  %421 = vmatprep.subr.mxu0 0.0
  %422 = vmatpush1.msra.mxu0 0.0
  %423 = vmatprep.subr.mxu0 0.0
  %424 = vmatpush1.msra.mxu0 0.0
  %425 = vmatprep.subr.mxu0 0.0
  %426 = vmatpush1.msra.mxu0 0.0
  %427 = vmatprep.subr.mxu0 0.0
  %428 = vmatpush1.msra.mxu0 0.0
  %429 = vmatprep.mubr.f32.mxu0 0.0
  %430 = vmatmul.mubr.f32.gmra.mrb[0].mxu0 %v342
  %v431 = vpop.f32.mrb[0].mxu0
  %v432 = vadd.f32 %v303, %v431
  %v433 = vpop.f32.mrb[0].mxu0
  %434 = vmatprep.mubr.f32.mxu0 0.0
  %435 = vmatmul.mubr.f32.gmra.mrb[0].mxu0 %v345
  %v436 = vpop.f32.mrb[0].mxu0
  %v437 = vadd.f32 %v308, %v436
  %v438 = vpop.f32.mrb[0].mxu0
  %439 = vmatprep.mubr.f32.mxu0 0.0
  %440 = vmatmul.mubr.f32.gmra.mrb[0].mxu0 %v348
  %v441 = vpop.f32.mrb[0].mxu0
  %v442 = vadd.f32 %v313, %v441
  %v443 = vpop.f32.mrb[0].mxu0
  %444 = vmatprep.mubr.f32.mxu0 0.0
  %445 = vmatmul.mubr.f32.gmra.mrb[0].mxu0 %v351
  %v446 = vpop.f32.mrb[0].mxu0
  %v447 = vadd.f32 %v318, %v446
  %v448 = vpop.f32.mrb[0].mxu0
  %449 = vmatprep.mubr.f32.mxu0 0.0
  %450 = vmatmul.mubr.f32.gmra.mrb[0].mxu0 %v354
  %v451 = vpop.f32.mrb[0].mxu0
  %v452 = vadd.f32 %v323, %v451
  %v453 = vpop.f32.mrb[0].mxu0
  %454 = vmatprep.mubr.f32.mxu0 0.0
  %455 = vmatmul.mubr.f32.gmra.mrb[0].mxu0 %v357
  %v456 = vpop.f32.mrb[0].mxu0
  %v457 = vadd.f32 %v328, %v456
  %v458 = vpop.f32.mrb[0].mxu0
  %459 = vmatprep.mubr.f32.mxu0 0.0
  %460 = vmatmul.mubr.f32.gmra.mrb[0].mxu0 %v360
  %v461 = vpop.f32.mrb[0].mxu0
  %v462 = vadd.f32 %v333, %v461
  %v463 = vpop.f32.mrb[0].mxu0
  %464 = vmatprep.mubr.f32.mxu0 0.0
  %465 = vmatmul.mubr.f32.gmra.mrb[0].mxu0 %v363
  %v466 = vpop.f32.mrb[0].mxu0
  %v467 = vadd.f32 %v338, %v466
  %v468 = vpop.f32.mrb[0].mxu0
  %469 = vdwg.mxu0
  %v470 = vmax.f32 %v432, 0.0
  %v471 = vmax.f32 %v437, 0.0
  %v472 = vmax.f32 %v442, 0.0
  %v473 = vmax.f32 %v447, 0.0
  %v474 = vmax.f32 %v452, 0.0
  %v475 = vmax.f32 %v457, 0.0
  %v476 = vmax.f32 %v462, 0.0
  %v477 = vmax.f32 %v467, 0.0
  %v478 = vld [vmem:[%s5] sm:$0xff]
  %v479 = vld [vmem:[%s5 + $0x8] sm:$0xff]
  %v480 = vld [vmem:[%s6] sm:$0xff]
  %v481 = vld [vmem:[%s6 + $0x8] sm:$0xff]
  %483 = vset.pattern.permute.xlu0 0
  %484 = vperm.xlu0 %483, %v480
  %v485 = vpop.permute.xlu0 %484
  %488 = vset.pattern.permute.xlu0 0
  %489 = vperm.xlu0 %488, %v481
  %v490 = vpop.permute.xlu0 %489
  %v493 = vsel %vm340, %v478, 0
  %v496 = vsel %vm340, %v479, 0
  %498 = vmatprep.subr.mxu0 0.0
  %499 = vmatpush1.msra.mxu0 %v470
  %500 = vmatprep.subr.mxu0 0.0
  %501 = vmatpush1.msra.mxu0 %v471
  %502 = vmatprep.subr.mxu0 0.0
  %503 = vmatpush1.msra.mxu0 %v472
  %504 = vmatprep.subr.mxu0 0.0
  %505 = vmatpush1.msra.mxu0 %v473
  %506 = vmatprep.subr.mxu0 0.0
  %507 = vmatpush1.msra.mxu0 %v474
  %508 = vmatprep.subr.mxu0 0.0
  %509 = vmatpush1.msra.mxu0 %v475
  %510 = vmatprep.subr.mxu0 0.0
  %511 = vmatpush1.msra.mxu0 %v476
  %512 = vmatprep.subr.mxu0 0.0
  %513 = vmatpush1.msra.mxu0 %v477
  %514 = vmatprep.subr.mxu0 0.0
  %515 = vmatpush1.msra.mxu0 0.0
  %516 = vmatprep.subr.mxu0 0.0
  %517 = vmatpush1.msra.mxu0 0.0
  %518 = vmatprep.subr.mxu0 0.0
  %519 = vmatpush1.msra.mxu0 0.0
  %520 = vmatprep.subr.mxu0 0.0
  %521 = vmatpush1.msra.mxu0 0.0
  %522 = vmatprep.subr.mxu0 0.0
  %523 = vmatpush1.msra.mxu0 0.0
  %524 = vmatprep.subr.mxu0 0.0
  %525 = vmatpush1.msra.mxu0 0.0
  %526 = vmatprep.subr.mxu0 0.0
  %527 = vmatpush1.msra.mxu0 0.0
  %528 = vmatprep.subr.mxu0 0.0
  %529 = vmatpush1.msra.mxu0 0.0
  %530 = vmatprep.subr.mxu0 0.0
  %531 = vmatpush1.msra.mxu0 0.0
  %532 = vmatprep.subr.mxu0 0.0
  %533 = vmatpush1.msra.mxu0 0.0
  %534 = vmatprep.subr.mxu0 0.0
  %535 = vmatpush1.msra.mxu0 0.0
  %536 = vmatprep.subr.mxu0 0.0
  %537 = vmatpush1.msra.mxu0 0.0
  %538 = vmatprep.subr.mxu0 0.0
  %539 = vmatpush1.msra.mxu0 0.0
  %540 = vmatprep.subr.mxu0 0.0
  %541 = vmatpush1.msra.mxu0 0.0
  %542 = vmatprep.subr.mxu0 0.0
  %543 = vmatpush1.msra.mxu0 0.0
  %544 = vmatprep.subr.mxu0 0.0
  %545 = vmatpush1.msra.mxu0 0.0
  %546 = vmatprep.subr.mxu0 0.0
  %547 = vmatpush1.msra.mxu0 0.0
  %548 = vmatprep.subr.mxu0 0.0
  %549 = vmatpush1.msra.mxu0 0.0
  %550 = vmatprep.subr.mxu0 0.0
  %551 = vmatpush1.msra.mxu0 0.0
  %552 = vmatprep.subr.mxu0 0.0
  %553 = vmatpush1.msra.mxu0 0.0
  %554 = vmatprep.subr.mxu0 0.0
  %555 = vmatpush1.msra.mxu0 0.0
  %556 = vmatprep.subr.mxu0 0.0
  %557 = vmatpush1.msra.mxu0 0.0
  %558 = vmatprep.subr.mxu0 0.0
  %559 = vmatpush1.msra.mxu0 0.0
  %560 = vmatprep.subr.mxu0 0.0
  %561 = vmatpush1.msra.mxu0 0.0
  %562 = vmatprep.mubr.f32.mxu0 0.0
  %563 = vmatmul.mubr.f32.gmra.mrb[0].mxu0 %v493
  %v564 = vpop.f32.mrb[0].mxu0
  %v565 = vadd.f32 %v485, %v564
  %v566 = vpop.f32.mrb[0].mxu0
  %567 = vmatprep.mubr.f32.mxu0 0.0
  %568 = vmatmul.mubr.f32.gmra.mrb[0].mxu0 %v496
  %v569 = vpop.f32.mrb[0].mxu0
  %v570 = vadd.f32 %v490, %v569
  %v571 = vpop.f32.mrb[0].mxu0
  %572 = vdwg.mxu0
  %573 = vxpose.xlu0.b32.start [1/16] %v565, 128
  %574 = vxpose.xlu0.b32.cont [2/16] %v570, 128
  %575 = vxpose.xlu0.b32.cont [3/16] 0.0, 128
  %576 = vxpose.xlu0.b32.cont [4/16] 0.0, 128
  %577 = vxpose.xlu0.b32.cont [5/16] 0.0, 128
  %578 = vxpose.xlu0.b32.cont [6/16] 0.0, 128
  %579 = vxpose.xlu0.b32.cont [7/16] 0.0, 128
  %580 = vxpose.xlu0.b32.cont [8/16] 0.0, 128
  %581 = vxpose.xlu0.b32.cont [9/16] 0.0, 128
  %582 = vxpose.xlu0.b32.cont [10/16] 0.0, 128
  %583 = vxpose.xlu0.b32.cont [11/16] 0.0, 128
  %584 = vxpose.xlu0.b32.cont [12/16] 0.0, 128
  %585 = vxpose.xlu0.b32.cont [13/16] 0.0, 128
  %586 = vxpose.xlu0.b32.cont [14/16] 0.0, 128
  %587 = vxpose.xlu0.b32.cont [15/16] 0.0, 128
  %588 = vxpose.xlu0.b32.end [16/16] 0.0, 128
  %v589 = vpop.trf.xlu0
  %v590 = vpop.trf.xlu0
  %v591 = vpop.trf.xlu0
  %v592 = vpop.trf.xlu0
  %v593 = vpop.trf.xlu0
  %v594 = vpop.trf.xlu0
  %v595 = vpop.trf.xlu0
  %v596 = vpop.trf.xlu0
  %v597 = vpop.trf.xlu0
  %v598 = vpop.trf.xlu0
  %v599 = vpop.trf.xlu0
  %v600 = vpop.trf.xlu0
  %v601 = vpop.trf.xlu0
  %v602 = vpop.trf.xlu0
  %v603 = vpop.trf.xlu0
  %v604 = vpop.trf.xlu0
  %vm605 = vcmask 130048
  %606 = vst.msk [vmem:[%s7] sm:$0xff] %vm605, %v589
  %607 = vst.msk [vmem:[%s7 + $0x8] sm:$0xff] %vm605, %v590
  %608 = vst.msk [vmem:[%s7 + $0x10] sm:$0xff] %vm605, %v591
  %609 = vst.msk [vmem:[%s7 + $0x18] sm:$0xff] %vm605, %v592
  %610 = vst.msk [vmem:[%s7 + $0x20] sm:$0xff] %vm605, %v593
  %611 = vst.msk [vmem:[%s7 + $0x28] sm:$0xff] %vm605, %v594
  %612 = vst.msk [vmem:[%s7 + $0x30] sm:$0xff] %vm605, %v595
  %613 = vst.msk [vmem:[%s7 + $0x38] sm:$0xff] %vm605, %v596
  %614 = vst.msk [vmem:[%s7 + $0x40] sm:$0xff] %vm605, %v597
  %615 = vst.msk [vmem:[%s7 + $0x48] sm:$0xff] %vm605, %v598
  %616 = vst.msk [vmem:[%s7 + $0x50] sm:$0xff] %vm605, %v599
  %617 = vst.msk [vmem:[%s7 + $0x58] sm:$0xff] %vm605, %v600
  %618 = vst.msk [vmem:[%s7 + $0x60] sm:$0xff] %vm605, %v601
  %619 = vst.msk [vmem:[%s7 + $0x68] sm:$0xff] %vm605, %v602
  %620 = vst.msk [vmem:[%s7 + $0x70] sm:$0xff] %vm605, %v603
  %621 = vst.msk [vmem:[%s7 + $0x78] sm:$0xff] %vm605, %v604
  // Predicated region
  $region30: #{tpu_custom_call.1} parent=0 // pred_check
    _
  $region31: #{tpu_custom_call.1} parent=0 // pred_check_branch
    %623 = sbr.rel (0) target = $region33
  $region32: #{tpu_custom_call.1} parent=0 // pred_region
    _
  $region33: #{tpu_custom_call.1} parent=0 // pred_fallthru
    _
  // Predicated region
  $region34: #{tpu_custom_call.1} parent=0 // pred_check
    _
  $region35: #{tpu_custom_call.1} parent=0 // pred_check_branch
    %625 = sbr.rel (0) target = $region37
  $region36: #{tpu_custom_call.1} parent=0 // pred_region
    _
  $region37: #{tpu_custom_call.1} parent=0 // pred_fallthru
    _

</llo_original>
